<compile_context>
chip_gen: v7x
topology: tpu7x:2x2x1
jax: 0.10.0
libtpu: 0.0.40
codegen_flags: <defaults>
</compile_context>

<pallas_src>
import jax
import jax.numpy as jnp
from jax.experimental import pallas as pl
from jax.experimental.pallas import tpu as pltpu

LANE = 128      # last-dim (lane) multiple
SUBLANE = 8     # second-to-last (sublane) multiple for f32
_NEG_FILL = -1e30   # hidden-layer bias pad -> sigmoid(pad) == 0 exactly


def _round_up(x, m):
    return (x + m - 1) // m * m


def _vmem_capacity_bytes():
    """Physical VMEM per TensorCore; conservative 64 MiB (v7x) fallback."""
    try:
        return int(pltpu.get_tpu_info().vmem_capacity_bytes)
    except Exception:
        return 64 << 20


def sae_kernel(x_ref,
               w1_ref, b1_ref,
               w2_ref, b2_ref,
               w3_ref, b3_ref,
               w4_ref, b4_ref,
               o_ref):
    """One (TM, Dp) batch tile of the SAE forward, entirely in VMEM."""

    def sigmoid(v):
        # exact sigmoid: exp -> EUP; the f32 divide is free (kernel is HBM-bound)
        return 1.0 / (1.0 + jnp.exp(-v))

    cdt = x_ref.dtype  # matmul input dtype (bf16 or f32); accumulate in f32

    x = x_ref[...]
    h1 = sigmoid(jnp.dot(x, w1_ref[...],
                         preferred_element_type=jnp.float32) + b1_ref[...])
    h2 = sigmoid(jnp.dot(h1.astype(cdt), w2_ref[...],
                         preferred_element_type=jnp.float32) + b2_ref[...])
    h3 = sigmoid(jnp.dot(h2.astype(cdt), w3_ref[...],
                         preferred_element_type=jnp.float32) + b3_ref[...])
    out = jnp.dot(h3.astype(cdt), w4_ref[...],
                  preferred_element_type=jnp.float32) + b4_ref[...]
    o_ref[...] = out.astype(o_ref.dtype)


def prepare_params(params, n_movies, n_nodes1=20, n_nodes2=10,
                   compute_dtype=jnp.bfloat16):
    """One-time prep outside the hot path: transpose weights to (in, out),
    zero-pad feature dims to 128-lane multiples, cast weights to the matmul
    dtype (biases stay f32 so bias-add / sigmoid run in f32).  Hidden-layer
    bias padding uses a large negative fill so padded hidden lanes are exactly
    sigmoid(-big) == 0, independent of downstream weight padding."""
    dp = _round_up(n_movies, LANE)
    h1p = _round_up(n_nodes1, LANE)
    h2p = _round_up(n_nodes2, LANE)
    dims = [(n_movies, n_nodes1, dp, h1p, _NEG_FILL),    # fc1 (sigmoid)
            (n_nodes1, n_nodes2, h1p, h2p, _NEG_FILL),   # fc2 (sigmoid)
            (n_nodes2, n_nodes1, h2p, h1p, _NEG_FILL),   # fc3 (sigmoid)
            (n_nodes1, n_movies, h1p, dp, 0.0)]          # fc4 (no activation)
    prepped = []
    for i, (in_f, out_f, in_p, out_p, bias_fill) in enumerate(dims, start=1):
        w = params[f"fc{i}_w"].T.astype(compute_dtype)        # (in, out)
        b = params[f"fc{i}_b"].astype(jnp.float32)[None, :]   # (1, out) f32
        w = jnp.pad(w, ((0, in_p - in_f), (0, out_p - out_f)))
        b = jnp.pad(b, ((0, 0), (0, out_p - out_f)), constant_values=bias_fill)
        prepped += [w, b]
    return tuple(prepped), (dp, h1p, h2p)


def sae_forward(x, prepared_params, padded_dims, *, n_movies,
                compute_dtype=jnp.bfloat16, out_dtype=None, block_m=512):
    """Fused SAE forward.  Returns (batch, n_movies) in out_dtype (defaults to
    compute_dtype so the writeback HBM stream is also halved at bf16)."""
    if out_dtype is None:
        out_dtype = compute_dtype
    batch = x.shape[0]
    dp, h1p, h2p = padded_dims

    # ---- input: pad the feature dim ONLY if n_movies is not lane-aligned ----
    x = x.astype(compute_dtype)
    if dp != n_movies:
        x = jnp.pad(x, ((0, 0), (0, dp - n_movies)))

    # ---- per-generation VMEM budget -> batch tile size TM --------------------
    in_sz = jnp.dtype(compute_dtype).itemsize
    out_sz = jnp.dtype(out_dtype).itemsize
    w_bytes = sum(int(a.size) * a.dtype.itemsize for a in prepared_params)
    capacity = _vmem_capacity_bytes()
    vmem_target = (capacity * 3) // 4         # ~48 MiB on v7x, ~96 MiB on v5e/v6e
    # per batch-row: double-buffered x/out tiles + f32 fc4 result + h1..h3 f32
    per_row = dp * (2 * in_sz + 2 * out_sz + 4) + 4 * 3 * max(h1p, h2p)
    fixed = 2 * w_bytes + (4 << 20)           # 2x-buffered resident weights + slack
    tm_budget = max(SUBLANE, (vmem_target - fixed) // per_row)
    tm_cap = max(SUBLANE, (min(block_m, tm_budget) // SUBLANE) * SUBLANE)

    if batch <= min(tm_cap, 2 * SUBLANE):
        tm = batch                            # single tile; block dim == array dim
    else:
        # >= 2 balanced tiles so ("parallel",) spans both v7x TensorCores and we
        # never pay ~2x padding waste from rounding batch up to a full tile.
        n_tiles = max(2, pl.cdiv(batch, tm_cap))
        tm = min(tm_cap, _round_up(pl.cdiv(batch, n_tiles), SUBLANE))
    grid = (pl.cdiv(batch, tm),)              # ragged tail rows dropped on store

    resident = lambda i: (0, 0)               # weights/biases stay put in VMEM
    in_specs = [pl.BlockSpec((tm, dp), lambda i: (i, 0))]
    for w, b in zip(prepared_params[0::2], prepared_params[1::2]):
        in_specs.append(pl.BlockSpec(w.shape, resident))
        in_specs.append(pl.BlockSpec(b.shape, resident))
    out_spec = pl.BlockSpec((tm, dp), lambda i: (i, 0))

    vmem_limit = int(min(capacity, 2 * w_bytes + tm * per_row + (16 << 20)))

    flops = 2 * batch * (dp * h1p + h1p * h2p + h2p * h1p + h1p * dp)
    cost = pl.CostEstimate(
        flops=flops,
        transcendentals=batch * (2 * h1p + h2p),      # one exp per hidden unit
        bytes_accessed=batch * dp * (in_sz + out_sz) + w_bytes,
    )

    out = pl.pallas_call(
        sae_kernel,
        out_shape=jax.ShapeDtypeStruct((batch, dp), out_dtype),
        grid=grid,
        in_specs=in_specs,
        out_specs=out_spec,
        compiler_params=pltpu.CompilerParams(
            dimension_semantics=("parallel",),        # both TCs on v7x
            vmem_limit_bytes=vmem_limit),
        cost_estimate=cost,
    )(x, *prepared_params)

    if dp != n_movies:
        out = out[:, :n_movies]
    return out


def init_params(key, n_movies, n_nodes1=20, n_nodes2=10):
    """Deterministic init mimicking nn.Linear default U(-1/sqrt(fan_in), ...)."""
    dims = [(n_nodes1, n_movies),   # fc1
            (n_nodes2, n_nodes1),   # fc2
            (n_nodes1, n_nodes2),   # fc3
            (n_movies, n_nodes1)]   # fc4
    params = {}
    for i, (out_f, in_f) in enumerate(dims, start=1):
        key, kw, kb = jax.random.split(key, 3)
        bound = 1.0 / jnp.sqrt(in_f)
        params[f"fc{i}_w"] = jax.random.uniform(
            kw, (out_f, in_f), jnp.float32, -bound, bound)
        params[f"fc{i}_b"] = jax.random.uniform(
            kb, (out_f,), jnp.float32, -bound, bound)
    return params


def sae_reference(x, params):
    """Pure-JAX reference of the PyTorch forward."""
    h = jax.nn.sigmoid(x @ params["fc1_w"].T + params["fc1_b"])
    h = jax.nn.sigmoid(h @ params["fc2_w"].T + params["fc2_b"])
    h = jax.nn.sigmoid(h @ params["fc3_w"].T + params["fc3_b"])
    return h @ params["fc4_w"].T + params["fc4_b"]


if __name__ == "__main__":
    key = jax.random.PRNGKey(0)
    n_movies, batch = 32, 8

    k_params, k_x = jax.random.split(key)
    params = init_params(k_params, n_movies)
    x = jax.random.uniform(k_x, (batch, n_movies), jnp.float32)

    ref = sae_reference(x, params)

    # default path: bf16 IO/weights/output, f32 accumulation + bias-add + sigmoid
    prep_bf16, dims_bf16 = prepare_params(params, n_movies,
                                          compute_dtype=jnp.bfloat16)
    out_bf16 = sae_forward(x, prep_bf16, dims_bf16, n_movies=n_movies,
                           compute_dtype=jnp.bfloat16)
    jax.block_until_ready(out_bf16)
    assert out_bf16.shape == (batch, n_movies)
    assert out_bf16.dtype == jnp.bfloat16
    assert jnp.allclose(out_bf16.astype(jnp.float32), ref,
                        atol=5e-2, rtol=5e-2), "bf16 kernel mismatch vs reference"

    # f32 path for tight numerical parity with the PyTorch module
    prep_f32, dims_f32 = prepare_params(params, n_movies,
                                        compute_dtype=jnp.float32)
    out_f32 = sae_forward(x, prep_f32, dims_f32, n_movies=n_movies,
                          compute_dtype=jnp.float32, out_dtype=jnp.float32)
    jax.block_until_ready(out_f32)
    assert jnp.allclose(out_f32, ref, atol=5e-3, rtol=5e-3), \
        "f32 kernel mismatch vs reference"

    print("KERNEL_OK")
</pallas_src>

<mosaic_0001>
module attributes {stable_mosaic.version = 11 : i64} {
  func.func @sae_kernel(%arg0: i32, %arg1: memref<8x128xbf16, #tpu.memory_space<vmem>>, %arg2: memref<128x128xbf16, #tpu.memory_space<vmem>>, %arg3: memref<1x128xf32, #tpu.memory_space<vmem>>, %arg4: memref<128x128xbf16, #tpu.memory_space<vmem>>, %arg5: memref<1x128xf32, #tpu.memory_space<vmem>>, %arg6: memref<128x128xbf16, #tpu.memory_space<vmem>>, %arg7: memref<1x128xf32, #tpu.memory_space<vmem>>, %arg8: memref<128x128xbf16, #tpu.memory_space<vmem>>, %arg9: memref<1x128xf32, #tpu.memory_space<vmem>>, %arg10: memref<8x128xbf16, #tpu.memory_space<vmem>>) attributes {dimension_semantics = [#tpu.dimension_semantics<parallel>], iteration_bounds = array<i64: 1>, scalar_prefetch = 0 : i64, scratch_operands = 0 : i64, tpu.core_type = #tpu.core_type<tc>, window_params = [{transform_indices = @transform_0, window_bounds = array<i64: 8, 128>}, {pipeline_mode = #tpu.pipeline_mode<synchronous>, transform_indices = @transform_1, window_bounds = array<i64: 128, 128>}, {pipeline_mode = #tpu.pipeline_mode<synchronous>, transform_indices = @transform_2, window_bounds = array<i64: 1, 128>}, {pipeline_mode = #tpu.pipeline_mode<synchronous>, transform_indices = @transform_3, window_bounds = array<i64: 128, 128>}, {pipeline_mode = #tpu.pipeline_mode<synchronous>, transform_indices = @transform_4, window_bounds = array<i64: 1, 128>}, {pipeline_mode = #tpu.pipeline_mode<synchronous>, transform_indices = @transform_5, window_bounds = array<i64: 128, 128>}, {pipeline_mode = #tpu.pipeline_mode<synchronous>, transform_indices = @transform_6, window_bounds = array<i64: 1, 128>}, {pipeline_mode = #tpu.pipeline_mode<synchronous>, transform_indices = @transform_7, window_bounds = array<i64: 128, 128>}, {pipeline_mode = #tpu.pipeline_mode<synchronous>, transform_indices = @transform_8, window_bounds = array<i64: 1, 128>}, {transform_indices = @transform_9, window_bounds = array<i64: 8, 128>}]} {
    %c0 = arith.constant 0 : index
    %c0_0 = arith.constant 0 : index
    %0 = vector.load %arg1[%c0, %c0_0] : memref<8x128xbf16, #tpu.memory_space<vmem>>, vector<8x128xbf16>
    %c0_1 = arith.constant 0 : index
    %c0_2 = arith.constant 0 : index
    %1 = vector.load %arg2[%c0_1, %c0_2] : memref<128x128xbf16, #tpu.memory_space<vmem>>, vector<128x128xbf16>
    %cst = arith.constant dense<0.000000e+00> : vector<8x128xf32>
    %2 = tpu.matmul %0, %1, %cst {dimension_numbers = #tpu.dot_dimension_numbers<[1], [0], [0], [1], [0, 0, 1, 1], [], []>} : vector<8x128xbf16>, vector<128x128xbf16>, vector<8x128xf32> -> vector<8x128xf32>
    %c0_3 = arith.constant 0 : index
    %c0_4 = arith.constant 0 : index
    %3 = vector.load %arg3[%c0_3, %c0_4] : memref<1x128xf32, #tpu.memory_space<vmem>>, vector<1x128xf32>
    %4 = vector.broadcast %3 : vector<1x128xf32> to vector<8x128xf32>
    %5 = arith.addf %2, %4 : vector<8x128xf32>
    %cst_5 = arith.constant 0.000000e+00 : f32
    %6 = vector.broadcast %cst_5 : f32 to vector<8x128xf32>
    %7 = arith.subf %6, %5 : vector<8x128xf32>
    %8 = math.exp %7 : vector<8x128xf32>
    %cst_6 = arith.constant 1.000000e+00 : f32
    %9 = vector.broadcast %cst_6 : f32 to vector<8x128xf32>
    %10 = arith.addf %9, %8 : vector<8x128xf32>
    %cst_7 = arith.constant 1.000000e+00 : f32
    %11 = vector.broadcast %cst_7 : f32 to vector<8x128xf32>
    %12 = arith.divf %11, %10 : vector<8x128xf32>
    %13 = arith.truncf %12 : vector<8x128xf32> to vector<8x128xbf16>
    %c0_8 = arith.constant 0 : index
    %c0_9 = arith.constant 0 : index
    %14 = vector.load %arg4[%c0_8, %c0_9] : memref<128x128xbf16, #tpu.memory_space<vmem>>, vector<128x128xbf16>
    %cst_10 = arith.constant dense<0.000000e+00> : vector<8x128xf32>
    %15 = tpu.matmul %13, %14, %cst_10 {dimension_numbers = #tpu.dot_dimension_numbers<[1], [0], [0], [1], [0, 0, 1, 1], [], []>} : vector<8x128xbf16>, vector<128x128xbf16>, vector<8x128xf32> -> vector<8x128xf32>
    %c0_11 = arith.constant 0 : index
    %c0_12 = arith.constant 0 : index
    %16 = vector.load %arg5[%c0_11, %c0_12] : memref<1x128xf32, #tpu.memory_space<vmem>>, vector<1x128xf32>
    %17 = vector.broadcast %16 : vector<1x128xf32> to vector<8x128xf32>
    %18 = arith.addf %15, %17 : vector<8x128xf32>
    %cst_13 = arith.constant 0.000000e+00 : f32
    %19 = vector.broadcast %cst_13 : f32 to vector<8x128xf32>
    %20 = arith.subf %19, %18 : vector<8x128xf32>
    %21 = math.exp %20 : vector<8x128xf32>
    %cst_14 = arith.constant 1.000000e+00 : f32
    %22 = vector.broadcast %cst_14 : f32 to vector<8x128xf32>
    %23 = arith.addf %22, %21 : vector<8x128xf32>
    %cst_15 = arith.constant 1.000000e+00 : f32
    %24 = vector.broadcast %cst_15 : f32 to vector<8x128xf32>
    %25 = arith.divf %24, %23 : vector<8x128xf32>
    %26 = arith.truncf %25 : vector<8x128xf32> to vector<8x128xbf16>
    %c0_16 = arith.constant 0 : index
    %c0_17 = arith.constant 0 : index
    %27 = vector.load %arg6[%c0_16, %c0_17] : memref<128x128xbf16, #tpu.memory_space<vmem>>, vector<128x128xbf16>
    %cst_18 = arith.constant dense<0.000000e+00> : vector<8x128xf32>
    %28 = tpu.matmul %26, %27, %cst_18 {dimension_numbers = #tpu.dot_dimension_numbers<[1], [0], [0], [1], [0, 0, 1, 1], [], []>} : vector<8x128xbf16>, vector<128x128xbf16>, vector<8x128xf32> -> vector<8x128xf32>
    %c0_19 = arith.constant 0 : index
    %c0_20 = arith.constant 0 : index
    %29 = vector.load %arg7[%c0_19, %c0_20] : memref<1x128xf32, #tpu.memory_space<vmem>>, vector<1x128xf32>
    %30 = vector.broadcast %29 : vector<1x128xf32> to vector<8x128xf32>
    %31 = arith.addf %28, %30 : vector<8x128xf32>
    %cst_21 = arith.constant 0.000000e+00 : f32
    %32 = vector.broadcast %cst_21 : f32 to vector<8x128xf32>
    %33 = arith.subf %32, %31 : vector<8x128xf32>
    %34 = math.exp %33 : vector<8x128xf32>
    %cst_22 = arith.constant 1.000000e+00 : f32
    %35 = vector.broadcast %cst_22 : f32 to vector<8x128xf32>
    %36 = arith.addf %35, %34 : vector<8x128xf32>
    %cst_23 = arith.constant 1.000000e+00 : f32
    %37 = vector.broadcast %cst_23 : f32 to vector<8x128xf32>
    %38 = arith.divf %37, %36 : vector<8x128xf32>
    %39 = arith.truncf %38 : vector<8x128xf32> to vector<8x128xbf16>
    %c0_24 = arith.constant 0 : index
    %c0_25 = arith.constant 0 : index
    %40 = vector.load %arg8[%c0_24, %c0_25] : memref<128x128xbf16, #tpu.memory_space<vmem>>, vector<128x128xbf16>
    %cst_26 = arith.constant dense<0.000000e+00> : vector<8x128xf32>
    %41 = tpu.matmul %39, %40, %cst_26 {dimension_numbers = #tpu.dot_dimension_numbers<[1], [0], [0], [1], [0, 0, 1, 1], [], []>} : vector<8x128xbf16>, vector<128x128xbf16>, vector<8x128xf32> -> vector<8x128xf32>
    %c0_27 = arith.constant 0 : index
    %c0_28 = arith.constant 0 : index
    %42 = vector.load %arg9[%c0_27, %c0_28] : memref<1x128xf32, #tpu.memory_space<vmem>>, vector<1x128xf32>
    %43 = vector.broadcast %42 : vector<1x128xf32> to vector<8x128xf32>
    %44 = arith.addf %41, %43 : vector<8x128xf32>
    %45 = arith.truncf %44 : vector<8x128xf32> to vector<8x128xbf16>
    %c0_29 = arith.constant 0 : index
    %c0_30 = arith.constant 0 : index
    %46 = vector.load %arg10[%c0_29, %c0_30] : memref<8x128xbf16, #tpu.memory_space<vmem>>, vector<8x128xbf16>
    tpu.vector_store %arg10[%c0_29, %c0_30], %45 {strides = array<i32>} : memref<8x128xbf16, #tpu.memory_space<vmem>>, vector<8x128xbf16>,
    return
  }
  func.func @transform_0(%arg0: i32) -> (i32, i32) {
    %c0_i32 = arith.constant 0 : i32
    %c0_i32_0 = arith.constant 0 : i32
    return %arg0, %c0_i32 : i32, i32
  }
  func.func @transform_1(%arg0: i32) -> (i32, i32) {
    %c0_i32 = arith.constant 0 : i32
    %c0_i32_0 = arith.constant 0 : i32
    %c0_i32_1 = arith.constant 0 : i32
    return %c0_i32, %c0_i32_0 : i32, i32
  }
  func.func @transform_2(%arg0: i32) -> (i32, i32) {
    %c0_i32 = arith.constant 0 : i32
    %c0_i32_0 = arith.constant 0 : i32
    %c0_i32_1 = arith.constant 0 : i32
    return %c0_i32, %c0_i32_0 : i32, i32
  }
  func.func @transform_3(%arg0: i32) -> (i32, i32) {
    %c0_i32 = arith.constant 0 : i32
    %c0_i32_0 = arith.constant 0 : i32
    %c0_i32_1 = arith.constant 0 : i32
    return %c0_i32, %c0_i32_0 : i32, i32
  }
  func.func @transform_4(%arg0: i32) -> (i32, i32) {
    %c0_i32 = arith.constant 0 : i32
    %c0_i32_0 = arith.constant 0 : i32
    %c0_i32_1 = arith.constant 0 : i32
    return %c0_i32, %c0_i32_0 : i32, i32
  }
  func.func @transform_5(%arg0: i32) -> (i32, i32) {
    %c0_i32 = arith.constant 0 : i32
    %c0_i32_0 = arith.constant 0 : i32
    %c0_i32_1 = arith.constant 0 : i32
    return %c0_i32, %c0_i32_0 : i32, i32
  }
  func.func @transform_6(%arg0: i32) -> (i32, i32) {
    %c0_i32 = arith.constant 0 : i32
    %c0_i32_0 = arith.constant 0 : i32
    %c0_i32_1 = arith.constant 0 : i32
    return %c0_i32, %c0_i32_0 : i32, i32
  }
  func.func @transform_7(%arg0: i32) -> (i32, i32) {
    %c0_i32 = arith.constant 0 : i32
    %c0_i32_0 = arith.constant 0 : i32
    %c0_i32_1 = arith.constant 0 : i32
    return %c0_i32, %c0_i32_0 : i32, i32
  }
  func.func @transform_8(%arg0: i32) -> (i32, i32) {
    %c0_i32 = arith.constant 0 : i32
    %c0_i32_0 = arith.constant 0 : i32
    %c0_i32_1 = arith.constant 0 : i32
    return %c0_i32, %c0_i32_0 : i32, i32
  }
  func.func @transform_9(%arg0: i32) -> (i32, i32) {
    %c0_i32 = arith.constant 0 : i32
    %c0_i32_0 = arith.constant 0 : i32
    return %arg0, %c0_i32 : i32, i32
  }
}

</mosaic_0001>

<llo_original>
// kernel: tpu_custom_call.1
$region0: #{tpu_custom_call.1}
  #allocation0 [shape = 'u32[]', space=smem, size = 0x4, offset = 0x4, fixed_abs, tag = 'smem constant byte address 0x4 - core index']
  #allocation1 [shape = 'u32[144,128]{1,0:T(1,128)}', space=vmem, size = 0x12000, scoped, tag = 'internal scratch']
  %s0 = inlined_call_operand.hbm [shape: bf16[8,128], index: 0, kind: input, shape index: {}]
  %s1 = inlined_call_operand.hbm [shape: bf16[128,128], index: 1, kind: input, shape index: {}]
  %s2 = inlined_call_operand.vmem [shape: f32[1,128], index: 2, kind: input, shape index: {}]
  %s3 = inlined_call_operand.hbm [shape: bf16[128,128], index: 3, kind: input, shape index: {}]
  %s4 = inlined_call_operand.vmem [shape: f32[1,128], index: 4, kind: input, shape index: {}]
  %s5 = inlined_call_operand.hbm [shape: bf16[128,128], index: 5, kind: input, shape index: {}]
  %s6 = inlined_call_operand.vmem [shape: f32[1,128], index: 6, kind: input, shape index: {}]
  %s7 = inlined_call_operand.hbm [shape: bf16[128,128], index: 7, kind: input, shape index: {}]
  %s8 = inlined_call_operand.vmem [shape: f32[1,128], index: 8, kind: input, shape index: {}]
  %s9 = inlined_call_operand.hbm [shape: bf16[8,128], index: 9, kind: output, shape index: {}]
  %s10 = sld [smem:[#allocation0]]
  $region66: #{tpu_custom_call.1} parent=0
    _
  %s12 = ssub.s32 1, %s10
  %s13 = scalar_select 0, %s12, %s10
  $region1: #{tpu_custom_call.1} parent=0
    #allocation2 [shape = 'u8[2048]{0}', space=vmem, size = 0x800, scoped, tag = 'input window, operand 0, single buffered']
    #allocation3 [shape = 's32[1]{0}', space=sflag, size = 0x4, scoped, tag = 'scoped memory for tpu_custom_call.1']
    #allocation4 [shape = 's32[1]{0}', space=sflag, size = 0x4, scoped, tag = 'scoped memory for tpu_custom_call.1']
    #allocation5 [shape = 'u8[32768]{0}', space=vmem, size = 0x8000, scoped, tag = 'input window, operand 1, single buffered']
    #allocation6 [shape = 's32[1]{0}', space=sflag, size = 0x4, scoped, tag = 'scoped memory for tpu_custom_call.1']
    #allocation7 [shape = 'u8[32768]{0}', space=vmem, size = 0x8000, scoped, tag = 'input window, operand 3, single buffered']
    #allocation8 [shape = 'u8[32768]{0}', space=vmem, size = 0x8000, scoped, tag = 'input window, operand 5, single buffered']
    #allocation9 [shape = 's32[1]{0}', space=sflag, size = 0x4, scoped, tag = 'scoped memory for tpu_custom_call.1']
    #allocation10 [shape = 'u8[32768]{0}', space=vmem, size = 0x8000, scoped, tag = 'input window, operand 7, single buffered']
    #allocation11 [shape = 'u8[2048]{0}', space=vmem, size = 0x800, scoped, tag = 'output window, operand 0, single buffered']
    %14 = vsyncpa [#allocation3], 0
    %15 = vsyncpa [#allocation6], 0
    %16 = vsyncpa [#allocation9], 0
    %17 = vsyncpa [#allocation4], 0
    // Predicated region
    $region2: #{tpu_custom_call.1} parent=1 // pred_check
      _
    $region3: #{tpu_custom_call.1} parent=1 // pred_check_branch
      %19 = sbr.rel (0) target = $region5
    $region4: #{tpu_custom_call.1} parent=1 // pred_region
      %s21 = ssub.s32 64, 64
      %22 = vsyncadd [#allocation3], %s21
      %s24 = sshll.u32 [#allocation2], 4
      %s25 = int_to_ptr.vmem [resolvable:$true] %s24
      %27 = dma.hbm_to_vmem [thread:$0]  %s0, 64, %s25, [#allocation3]
    $region5: #{tpu_custom_call.1} parent=1 // pred_fallthru
      _
    // Predicated region
    $region6: #{tpu_custom_call.1} parent=1 // pred_check
      _
    $region7: #{tpu_custom_call.1} parent=1 // pred_check_branch
      %29 = sbr.rel (0) target = $region9
    $region8: #{tpu_custom_call.1} parent=1 // pred_region
      %s31 = ssub.s32 1024, 1024
      %32 = vsyncadd [#allocation6], %s31
      %s33 = sshll.u32 [#allocation5], 4
      %s34 = int_to_ptr.vmem [resolvable:$true] %s33
      %39 = dma.hbm_to_vmem [thread:$0]  %s1, 1024, %s34, [#allocation6], 64, 64, 4
    $region9: #{tpu_custom_call.1} parent=1 // pred_fallthru
      _
    // Predicated region
    $region10: #{tpu_custom_call.1} parent=1 // pred_check
      _
    $region11: #{tpu_custom_call.1} parent=1 // pred_check_branch
      %41 = sbr.rel (0) target = $region13
    $region12: #{tpu_custom_call.1} parent=1 // pred_region
      _
    $region13: #{tpu_custom_call.1} parent=1 // pred_fallthru
      _
    // Predicated region
    $region14: #{tpu_custom_call.1} parent=1 // pred_check
      _
    $region15: #{tpu_custom_call.1} parent=1 // pred_check_branch
      %43 = sbr.rel (0) target = $region17
    $region16: #{tpu_custom_call.1} parent=1 // pred_region
      %s45 = ssub.s32 1024, 1024
      %46 = vsyncadd [#allocation6], %s45
      %s47 = sshll.u32 [#allocation7], 4
      %s48 = int_to_ptr.vmem [resolvable:$true] %s47
      %53 = dma.hbm_to_vmem [thread:$0]  %s3, 1024, %s48, [#allocation6], 64, 64, 4
    $region17: #{tpu_custom_call.1} parent=1 // pred_fallthru
      _
    // Predicated region
    $region18: #{tpu_custom_call.1} parent=1 // pred_check
      _
    $region19: #{tpu_custom_call.1} parent=1 // pred_check_branch
      %55 = sbr.rel (0) target = $region21
    $region20: #{tpu_custom_call.1} parent=1 // pred_region
      _
    $region21: #{tpu_custom_call.1} parent=1 // pred_fallthru
      _
    // Predicated region
    $region22: #{tpu_custom_call.1} parent=1 // pred_check
      _
    $region23: #{tpu_custom_call.1} parent=1 // pred_check_branch
      %57 = sbr.rel (0) target = $region25
    $region24: #{tpu_custom_call.1} parent=1 // pred_region
      %s59 = ssub.s32 1024, 1024
      %60 = vsyncadd [#allocation9], %s59
      %s61 = sshll.u32 [#allocation8], 4
      %s62 = int_to_ptr.vmem [resolvable:$true] %s61
      %67 = dma.hbm_to_vmem [thread:$0]  %s5, 1024, %s62, [#allocation9], 64, 64, 4
    $region25: #{tpu_custom_call.1} parent=1 // pred_fallthru
      _
    // Predicated region
    $region26: #{tpu_custom_call.1} parent=1 // pred_check
      _
    $region27: #{tpu_custom_call.1} parent=1 // pred_check_branch
      %69 = sbr.rel (0) target = $region29
    $region28: #{tpu_custom_call.1} parent=1 // pred_region
      _
    $region29: #{tpu_custom_call.1} parent=1 // pred_fallthru
      _
    // Predicated region
    $region30: #{tpu_custom_call.1} parent=1 // pred_check
      _
    $region31: #{tpu_custom_call.1} parent=1 // pred_check_branch
      %71 = sbr.rel (0) target = $region33
    $region32: #{tpu_custom_call.1} parent=1 // pred_region
      %s73 = ssub.s32 1024, 1024
      %74 = vsyncadd [#allocation9], %s73
      %s75 = sshll.u32 [#allocation10], 4
      %s76 = int_to_ptr.vmem [resolvable:$true] %s75
      %81 = dma.hbm_to_vmem [thread:$0]  %s7, 1024, %s76, [#allocation9], 64, 64, 4
    $region33: #{tpu_custom_call.1} parent=1 // pred_fallthru
      _
    // Predicated region
    $region34: #{tpu_custom_call.1} parent=1 // pred_check
      _
    $region35: #{tpu_custom_call.1} parent=1 // pred_check_branch
      %83 = sbr.rel (0) target = $region37
    $region36: #{tpu_custom_call.1} parent=1 // pred_region
      _
    $region37: #{tpu_custom_call.1} parent=1 // pred_fallthru
      _
    // Predicated region
    $region38: #{tpu_custom_call.1} parent=1 // pred_check
      _
    $region39: #{tpu_custom_call.1} parent=1 // pred_check_branch
      %85 = sbr.rel (0) target = $region41
    $region40: #{tpu_custom_call.1} parent=1 // pred_region
      %86 = dma.done [#allocation3], 64
    $region41: #{tpu_custom_call.1} parent=1 // pred_fallthru
      _
    // Predicated region
    $region42: #{tpu_custom_call.1} parent=1 // pred_check
      _
    $region43: #{tpu_custom_call.1} parent=1 // pred_check_branch
      %88 = sbr.rel (0) target = $region45
    $region44: #{tpu_custom_call.1} parent=1 // pred_region
      %89 = dma.done [#allocation6], 1024
    $region45: #{tpu_custom_call.1} parent=1 // pred_fallthru
      _
    // Predicated region
    $region46: #{tpu_custom_call.1} parent=1 // pred_check
      _
    $region47: #{tpu_custom_call.1} parent=1 // pred_check_branch
      %91 = sbr.rel (0) target = $region49
    $region48: #{tpu_custom_call.1} parent=1 // pred_region
      %92 = dma.done [#allocation6], 1024
    $region49: #{tpu_custom_call.1} parent=1 // pred_fallthru
      _
    // Predicated region
    $region50: #{tpu_custom_call.1} parent=1 // pred_check
      _
    $region51: #{tpu_custom_call.1} parent=1 // pred_check_branch
      %94 = sbr.rel (0) target = $region53
    $region52: #{tpu_custom_call.1} parent=1 // pred_region
      %95 = dma.done [#allocation9], 1024
    $region53: #{tpu_custom_call.1} parent=1 // pred_fallthru
      _
    // Predicated region
    $region54: #{tpu_custom_call.1} parent=1 // pred_check
      _
    $region55: #{tpu_custom_call.1} parent=1 // pred_check_branch
      %97 = sbr.rel (0) target = $region57
    $region56: #{tpu_custom_call.1} parent=1 // pred_region
      %98 = dma.done [#allocation9], 1024
    $region57: #{tpu_custom_call.1} parent=1 // pred_fallthru
      _
    %v100 = vld [vmem:[#allocation2] sm:$0xf]
    %v101 = vld [vmem:[#allocation5] sm:$0xf]
    %v102 = vld [vmem:[#allocation5 + $0x4] sm:$0xf]
    %v103 = vld [vmem:[#allocation5 + $0x8] sm:$0xf]
    %v104 = vld [vmem:[#allocation5 + $0xc] sm:$0xf]
    %v105 = vld [vmem:[#allocation5 + $0x10] sm:$0xf]
    %v106 = vld [vmem:[#allocation5 + $0x14] sm:$0xf]
    %v107 = vld [vmem:[#allocation5 + $0x18] sm:$0xf]
    %v108 = vld [vmem:[#allocation5 + $0x1c] sm:$0xf]
    %v109 = vld [vmem:[#allocation5 + $0x20] sm:$0xf]
    %v110 = vld [vmem:[#allocation5 + $0x24] sm:$0xf]
    %v111 = vld [vmem:[#allocation5 + $0x28] sm:$0xf]
    %v112 = vld [vmem:[#allocation5 + $0x2c] sm:$0xf]
    %v113 = vld [vmem:[#allocation5 + $0x30] sm:$0xf]
    %v114 = vld [vmem:[#allocation5 + $0x34] sm:$0xf]
    %v115 = vld [vmem:[#allocation5 + $0x38] sm:$0xf]
    %v116 = vld [vmem:[#allocation5 + $0x3c] sm:$0xf]
    %v117 = vld [vmem:[%s2] sm:$0x1]
    %v119 = vlaneseq
    %v120 = vshrl.u32 %v119, 7
    %v121 = vsub.s32 0, %v120
    %v122 = vrot.slane %v117, %v121
    %v140 = vunpack.c.l.b16 %v101
    %v141 = vunpack.c.l.b16 %v102
    %v142 = vunpack.c.l.b16 %v103
    %v143 = vunpack.c.l.b16 %v104
    %v144 = vunpack.c.l.b16 %v105
    %v145 = vunpack.c.l.b16 %v106
    %v146 = vunpack.c.l.b16 %v107
    %v147 = vunpack.c.l.b16 %v108
    %v148 = vunpack.c.l.b16 %v109
    %v149 = vunpack.c.l.b16 %v110
    %v150 = vunpack.c.l.b16 %v111
    %v151 = vunpack.c.l.b16 %v112
    %v152 = vunpack.c.l.b16 %v113
    %v153 = vunpack.c.l.b16 %v114
    %v154 = vunpack.c.l.b16 %v115
    %v155 = vunpack.c.l.b16 %v116
    %v156 = vpack.c.b16 %v141, %v140
    %v157 = vpack.c.b16 %v143, %v142
    %v158 = vpack.c.b16 %v145, %v144
    %v159 = vpack.c.b16 %v147, %v146
    %v160 = vpack.c.b16 %v149, %v148
    %v161 = vpack.c.b16 %v151, %v150
    %v162 = vpack.c.b16 %v153, %v152
    %v163 = vpack.c.b16 %v155, %v154
    %172 = vmatprep.subr.bf16.mxu0 0
    %173 = vmatpush1.bf16.msra.mxu0 %v156
    %174 = vmatprep.subr.bf16.mxu0 0
    %175 = vmatpush1.bf16.msra.mxu0 %v157
    %176 = vmatprep.subr.bf16.mxu0 0
    %177 = vmatpush1.bf16.msra.mxu0 %v158
    %178 = vmatprep.subr.bf16.mxu0 0
    %179 = vmatpush1.bf16.msra.mxu0 %v159
    %180 = vmatprep.subr.bf16.mxu0 0
    %181 = vmatpush1.bf16.msra.mxu0 %v160
    %182 = vmatprep.subr.bf16.mxu0 0
    %183 = vmatpush1.bf16.msra.mxu0 %v161
    %184 = vmatprep.subr.bf16.mxu0 0
    %185 = vmatpush1.bf16.msra.mxu0 %v162
    %186 = vmatprep.subr.bf16.mxu0 0
    %187 = vmatpush1.bf16.msra.mxu0 %v163
    %188 = vmatprep.subr.bf16.mxu0 0
    %189 = vmatpush1.bf16.msra.mxu0 0
    %190 = vmatprep.subr.bf16.mxu0 0
    %191 = vmatpush1.bf16.msra.mxu0 0
    %192 = vmatprep.subr.bf16.mxu0 0
    %193 = vmatpush1.bf16.msra.mxu0 0
    %194 = vmatprep.subr.bf16.mxu0 0
    %195 = vmatpush1.bf16.msra.mxu0 0
    %196 = vmatprep.subr.bf16.mxu0 0
    %197 = vmatpush1.bf16.msra.mxu0 0
    %198 = vmatprep.subr.bf16.mxu0 0
    %199 = vmatpush1.bf16.msra.mxu0 0
    %200 = vmatprep.subr.bf16.mxu0 0
    %201 = vmatpush1.bf16.msra.mxu0 0
    %202 = vmatprep.subr.bf16.mxu0 0
    %203 = vmatpush1.bf16.msra.mxu0 0
    %204 = vmatprep.mubr.bf16.mxu0 0
    %205 = vmatmul.mubr.bf16.gmra.mrb[0].mxu0 %v100
    %v206 = vpop.f32.mrb[0].mxu0
    %v207 = vadd.f32 %v122, %v206
    %v208 = vpop.f32.mrb[0].mxu0
    %v209 = vpop.f32.mrb[0].mxu0
    %v210 = vpop.f32.mrb[0].mxu0
    %211 = vdwg.mxu0
    %v212 = vsub.f32 0.0, %v207
    %v213 = vmul.f32 %v212, 1.442695
    %v214 = vpow.pop %v213
    %v215 = vadd.f32 %v214, 1.0
    %v216 = vrcp.pop %v215
    %v217 = vmul.f32 1.0, %v216
    %v218 = vpack.c.bf16 %v217, %v217
    %v219 = vld [vmem:[#allocation7] sm:$0xf]
    %v220 = vld [vmem:[#allocation7 + $0x4] sm:$0xf]
    %v221 = vld [vmem:[#allocation7 + $0x8] sm:$0xf]
    %v222 = vld [vmem:[#allocation7 + $0xc] sm:$0xf]
    %v223 = vld [vmem:[#allocation7 + $0x10] sm:$0xf]
    %v224 = vld [vmem:[#allocation7 + $0x14] sm:$0xf]
    %v225 = vld [vmem:[#allocation7 + $0x18] sm:$0xf]
    %v226 = vld [vmem:[#allocation7 + $0x1c] sm:$0xf]
    %v227 = vld [vmem:[#allocation7 + $0x20] sm:$0xf]
    %v228 = vld [vmem:[#allocation7 + $0x24] sm:$0xf]
    %v229 = vld [vmem:[#allocation7 + $0x28] sm:$0xf]
    %v230 = vld [vmem:[#allocation7 + $0x2c] sm:$0xf]
    %v231 = vld [vmem:[#allocation7 + $0x30] sm:$0xf]
    %v232 = vld [vmem:[#allocation7 + $0x34] sm:$0xf]
    %v233 = vld [vmem:[#allocation7 + $0x38] sm:$0xf]
    %v234 = vld [vmem:[#allocation7 + $0x3c] sm:$0xf]
    %v235 = vld [vmem:[%s4] sm:$0x1]
    %v237 = vlaneseq
    %v238 = vshrl.u32 %v237, 7
    %v239 = vsub.s32 0, %v238
    %v240 = vrot.slane %v235, %v239
    %v258 = vunpack.c.l.b16 %v219
    %v259 = vunpack.c.l.b16 %v220
    %v260 = vunpack.c.l.b16 %v221
    %v261 = vunpack.c.l.b16 %v222
    %v262 = vunpack.c.l.b16 %v223
    %v263 = vunpack.c.l.b16 %v224
    %v264 = vunpack.c.l.b16 %v225
    %v265 = vunpack.c.l.b16 %v226
    %v266 = vunpack.c.l.b16 %v227
    %v267 = vunpack.c.l.b16 %v228
    %v268 = vunpack.c.l.b16 %v229
    %v269 = vunpack.c.l.b16 %v230
    %v270 = vunpack.c.l.b16 %v231
    %v271 = vunpack.c.l.b16 %v232
    %v272 = vunpack.c.l.b16 %v233
    %v273 = vunpack.c.l.b16 %v234
    %v274 = vpack.c.b16 %v259, %v258
    %v275 = vpack.c.b16 %v261, %v260
    %v276 = vpack.c.b16 %v263, %v262
    %v277 = vpack.c.b16 %v265, %v264
    %v278 = vpack.c.b16 %v267, %v266
    %v279 = vpack.c.b16 %v269, %v268
    %v280 = vpack.c.b16 %v271, %v270
    %v281 = vpack.c.b16 %v273, %v272
    %290 = vmatprep.subr.bf16.mxu0 0
    %291 = vmatpush1.bf16.msra.mxu0 %v274
    %292 = vmatprep.subr.bf16.mxu0 0
    %293 = vmatpush1.bf16.msra.mxu0 %v275
    %294 = vmatprep.subr.bf16.mxu0 0
    %295 = vmatpush1.bf16.msra.mxu0 %v276
    %296 = vmatprep.subr.bf16.mxu0 0
    %297 = vmatpush1.bf16.msra.mxu0 %v277
    %298 = vmatprep.subr.bf16.mxu0 0
    %299 = vmatpush1.bf16.msra.mxu0 %v278
    %300 = vmatprep.subr.bf16.mxu0 0
    %301 = vmatpush1.bf16.msra.mxu0 %v279
    %302 = vmatprep.subr.bf16.mxu0 0
    %303 = vmatpush1.bf16.msra.mxu0 %v280
    %304 = vmatprep.subr.bf16.mxu0 0
    %305 = vmatpush1.bf16.msra.mxu0 %v281
    %306 = vmatprep.subr.bf16.mxu0 0
    %307 = vmatpush1.bf16.msra.mxu0 0
    %308 = vmatprep.subr.bf16.mxu0 0
    %309 = vmatpush1.bf16.msra.mxu0 0
    %310 = vmatprep.subr.bf16.mxu0 0
    %311 = vmatpush1.bf16.msra.mxu0 0
    %312 = vmatprep.subr.bf16.mxu0 0
    %313 = vmatpush1.bf16.msra.mxu0 0
    %314 = vmatprep.subr.bf16.mxu0 0
    %315 = vmatpush1.bf16.msra.mxu0 0
    %316 = vmatprep.subr.bf16.mxu0 0
    %317 = vmatpush1.bf16.msra.mxu0 0
    %318 = vmatprep.subr.bf16.mxu0 0
    %319 = vmatpush1.bf16.msra.mxu0 0
    %320 = vmatprep.subr.bf16.mxu0 0
    %321 = vmatpush1.bf16.msra.mxu0 0
    %322 = vmatprep.mubr.bf16.mxu0 0
    %323 = vmatmul.mubr.bf16.gmra.mrb[0].mxu0 %v218
    %v324 = vpop.f32.mrb[0].mxu0
    %v325 = vadd.f32 %v240, %v324
    %v326 = vpop.f32.mrb[0].mxu0
    %v327 = vpop.f32.mrb[0].mxu0
    %v328 = vpop.f32.mrb[0].mxu0
    %329 = vdwg.mxu0
    %v330 = vsub.f32 0.0, %v325
    %v331 = vmul.f32 %v330, 1.442695
    %v332 = vpow.pop %v331
    %v333 = vadd.f32 %v332, 1.0
    %v334 = vrcp.pop %v333
    %v335 = vmul.f32 1.0, %v334
    %v336 = vpack.c.bf16 %v335, %v335
    %v337 = vld [vmem:[#allocation8] sm:$0xf]
    %v338 = vld [vmem:[#allocation8 + $0x4] sm:$0xf]
    %v339 = vld [vmem:[#allocation8 + $0x8] sm:$0xf]
    %v340 = vld [vmem:[#allocation8 + $0xc] sm:$0xf]
    %v341 = vld [vmem:[#allocation8 + $0x10] sm:$0xf]
    %v342 = vld [vmem:[#allocation8 + $0x14] sm:$0xf]
    %v343 = vld [vmem:[#allocation8 + $0x18] sm:$0xf]
    %v344 = vld [vmem:[#allocation8 + $0x1c] sm:$0xf]
    %v345 = vld [vmem:[#allocation8 + $0x20] sm:$0xf]
    %v346 = vld [vmem:[#allocation8 + $0x24] sm:$0xf]
    %v347 = vld [vmem:[#allocation8 + $0x28] sm:$0xf]
    %v348 = vld [vmem:[#allocation8 + $0x2c] sm:$0xf]
    %v349 = vld [vmem:[#allocation8 + $0x30] sm:$0xf]
    %v350 = vld [vmem:[#allocation8 + $0x34] sm:$0xf]
    %v351 = vld [vmem:[#allocation8 + $0x38] sm:$0xf]
    %v352 = vld [vmem:[#allocation8 + $0x3c] sm:$0xf]
    %v353 = vld [vmem:[%s6] sm:$0x1]
    %v355 = vlaneseq
    %v356 = vshrl.u32 %v355, 7
    %v357 = vsub.s32 0, %v356
    %v358 = vrot.slane %v353, %v357
    %v376 = vunpack.c.l.b16 %v337
    %v377 = vunpack.c.l.b16 %v338
    %v378 = vunpack.c.l.b16 %v339
    %v379 = vunpack.c.l.b16 %v340
    %v380 = vunpack.c.l.b16 %v341
    %v381 = vunpack.c.l.b16 %v342
    %v382 = vunpack.c.l.b16 %v343
    %v383 = vunpack.c.l.b16 %v344
    %v384 = vunpack.c.l.b16 %v345
    %v385 = vunpack.c.l.b16 %v346
    %v386 = vunpack.c.l.b16 %v347
    %v387 = vunpack.c.l.b16 %v348
    %v388 = vunpack.c.l.b16 %v349
    %v389 = vunpack.c.l.b16 %v350
    %v390 = vunpack.c.l.b16 %v351
    %v391 = vunpack.c.l.b16 %v352
    %v392 = vpack.c.b16 %v377, %v376
    %v393 = vpack.c.b16 %v379, %v378
    %v394 = vpack.c.b16 %v381, %v380
    %v395 = vpack.c.b16 %v383, %v382
    %v396 = vpack.c.b16 %v385, %v384
    %v397 = vpack.c.b16 %v387, %v386
    %v398 = vpack.c.b16 %v389, %v388
    %v399 = vpack.c.b16 %v391, %v390
    %408 = vmatprep.subr.bf16.mxu0 0
    %409 = vmatpush1.bf16.msra.mxu0 %v392
    %410 = vmatprep.subr.bf16.mxu0 0
    %411 = vmatpush1.bf16.msra.mxu0 %v393
    %412 = vmatprep.subr.bf16.mxu0 0
    %413 = vmatpush1.bf16.msra.mxu0 %v394
    %414 = vmatprep.subr.bf16.mxu0 0
    %415 = vmatpush1.bf16.msra.mxu0 %v395
    %416 = vmatprep.subr.bf16.mxu0 0
    %417 = vmatpush1.bf16.msra.mxu0 %v396
    %418 = vmatprep.subr.bf16.mxu0 0
    %419 = vmatpush1.bf16.msra.mxu0 %v397
    %420 = vmatprep.subr.bf16.mxu0 0
    %421 = vmatpush1.bf16.msra.mxu0 %v398
    %422 = vmatprep.subr.bf16.mxu0 0
    %423 = vmatpush1.bf16.msra.mxu0 %v399
    %424 = vmatprep.subr.bf16.mxu0 0
    %425 = vmatpush1.bf16.msra.mxu0 0
    %426 = vmatprep.subr.bf16.mxu0 0
    %427 = vmatpush1.bf16.msra.mxu0 0
    %428 = vmatprep.subr.bf16.mxu0 0
    %429 = vmatpush1.bf16.msra.mxu0 0
    %430 = vmatprep.subr.bf16.mxu0 0
    %431 = vmatpush1.bf16.msra.mxu0 0
    %432 = vmatprep.subr.bf16.mxu0 0
    %433 = vmatpush1.bf16.msra.mxu0 0
    %434 = vmatprep.subr.bf16.mxu0 0
    %435 = vmatpush1.bf16.msra.mxu0 0
    %436 = vmatprep.subr.bf16.mxu0 0
    %437 = vmatpush1.bf16.msra.mxu0 0
    %438 = vmatprep.subr.bf16.mxu0 0
    %439 = vmatpush1.bf16.msra.mxu0 0
    %440 = vmatprep.mubr.bf16.mxu0 0
    %441 = vmatmul.mubr.bf16.gmra.mrb[0].mxu0 %v336
    %v442 = vpop.f32.mrb[0].mxu0
    %v443 = vadd.f32 %v358, %v442
    %v444 = vpop.f32.mrb[0].mxu0
    %v445 = vpop.f32.mrb[0].mxu0
    %v446 = vpop.f32.mrb[0].mxu0
    %447 = vdwg.mxu0
    %v448 = vsub.f32 0.0, %v443
    %v449 = vmul.f32 %v448, 1.442695
    %v450 = vpow.pop %v449
    %v451 = vadd.f32 %v450, 1.0
    %v452 = vrcp.pop %v451
    %v453 = vmul.f32 1.0, %v452
    %v454 = vpack.c.bf16 %v453, %v453
    %v455 = vld [vmem:[#allocation10] sm:$0xf]
    %v456 = vld [vmem:[#allocation10 + $0x4] sm:$0xf]
    %v457 = vld [vmem:[#allocation10 + $0x8] sm:$0xf]
    %v458 = vld [vmem:[#allocation10 + $0xc] sm:$0xf]
    %v459 = vld [vmem:[#allocation10 + $0x10] sm:$0xf]
    %v460 = vld [vmem:[#allocation10 + $0x14] sm:$0xf]
    %v461 = vld [vmem:[#allocation10 + $0x18] sm:$0xf]
    %v462 = vld [vmem:[#allocation10 + $0x1c] sm:$0xf]
    %v463 = vld [vmem:[#allocation10 + $0x20] sm:$0xf]
    %v464 = vld [vmem:[#allocation10 + $0x24] sm:$0xf]
    %v465 = vld [vmem:[#allocation10 + $0x28] sm:$0xf]
    %v466 = vld [vmem:[#allocation10 + $0x2c] sm:$0xf]
    %v467 = vld [vmem:[#allocation10 + $0x30] sm:$0xf]
    %v468 = vld [vmem:[#allocation10 + $0x34] sm:$0xf]
    %v469 = vld [vmem:[#allocation10 + $0x38] sm:$0xf]
    %v470 = vld [vmem:[#allocation10 + $0x3c] sm:$0xf]
    %v471 = vld [vmem:[%s8] sm:$0x1]
    %v473 = vlaneseq
    %v474 = vshrl.u32 %v473, 7
    %v475 = vsub.s32 0, %v474
    %v476 = vrot.slane %v471, %v475
    %v494 = vunpack.c.l.b16 %v455
    %v495 = vunpack.c.l.b16 %v456
    %v496 = vunpack.c.l.b16 %v457
    %v497 = vunpack.c.l.b16 %v458
    %v498 = vunpack.c.l.b16 %v459
    %v499 = vunpack.c.l.b16 %v460
    %v500 = vunpack.c.l.b16 %v461
    %v501 = vunpack.c.l.b16 %v462
    %v502 = vunpack.c.l.b16 %v463
    %v503 = vunpack.c.l.b16 %v464
    %v504 = vunpack.c.l.b16 %v465
    %v505 = vunpack.c.l.b16 %v466
    %v506 = vunpack.c.l.b16 %v467
    %v507 = vunpack.c.l.b16 %v468
    %v508 = vunpack.c.l.b16 %v469
    %v509 = vunpack.c.l.b16 %v470
    %v510 = vpack.c.b16 %v495, %v494
    %v511 = vpack.c.b16 %v497, %v496
    %v512 = vpack.c.b16 %v499, %v498
    %v513 = vpack.c.b16 %v501, %v500
    %v514 = vpack.c.b16 %v503, %v502
    %v515 = vpack.c.b16 %v505, %v504
    %v516 = vpack.c.b16 %v507, %v506
    %v517 = vpack.c.b16 %v509, %v508
    %526 = vmatprep.subr.bf16.mxu0 0
    %527 = vmatpush1.bf16.msra.mxu0 %v510
    %528 = vmatprep.subr.bf16.mxu0 0
    %529 = vmatpush1.bf16.msra.mxu0 %v511
    %530 = vmatprep.subr.bf16.mxu0 0
    %531 = vmatpush1.bf16.msra.mxu0 %v512
    %532 = vmatprep.subr.bf16.mxu0 0
    %533 = vmatpush1.bf16.msra.mxu0 %v513
    %534 = vmatprep.subr.bf16.mxu0 0
    %535 = vmatpush1.bf16.msra.mxu0 %v514
    %536 = vmatprep.subr.bf16.mxu0 0
    %537 = vmatpush1.bf16.msra.mxu0 %v515
    %538 = vmatprep.subr.bf16.mxu0 0
    %539 = vmatpush1.bf16.msra.mxu0 %v516
    %540 = vmatprep.subr.bf16.mxu0 0
    %541 = vmatpush1.bf16.msra.mxu0 %v517
    %542 = vmatprep.subr.bf16.mxu0 0
    %543 = vmatpush1.bf16.msra.mxu0 0
    %544 = vmatprep.subr.bf16.mxu0 0
    %545 = vmatpush1.bf16.msra.mxu0 0
    %546 = vmatprep.subr.bf16.mxu0 0
    %547 = vmatpush1.bf16.msra.mxu0 0
    %548 = vmatprep.subr.bf16.mxu0 0
    %549 = vmatpush1.bf16.msra.mxu0 0
    %550 = vmatprep.subr.bf16.mxu0 0
    %551 = vmatpush1.bf16.msra.mxu0 0
    %552 = vmatprep.subr.bf16.mxu0 0
    %553 = vmatpush1.bf16.msra.mxu0 0
    %554 = vmatprep.subr.bf16.mxu0 0
    %555 = vmatpush1.bf16.msra.mxu0 0
    %556 = vmatprep.subr.bf16.mxu0 0
    %557 = vmatpush1.bf16.msra.mxu0 0
    %558 = vmatprep.mubr.bf16.mxu0 0
    %559 = vmatmul.mubr.bf16.gmra.mrb[0].mxu0 %v454
    %v560 = vpop.f32.mrb[0].mxu0
    %v561 = vadd.f32 %v476, %v560
    %v562 = vpop.f32.mrb[0].mxu0
    %v563 = vpop.f32.mrb[0].mxu0
    %v564 = vpop.f32.mrb[0].mxu0
    %565 = vdwg.mxu0
    %v566 = vpack.c.bf16 %v561, %v561
    %567 = vst [vmem:[#allocation11] sm:$0xf] %v566
    // Predicated region
    $region58: #{tpu_custom_call.1} parent=1 // pred_check
      _
    $region59: #{tpu_custom_call.1} parent=1 // pred_check_branch
      %569 = sbr.rel (0) target = $region61
    $region60: #{tpu_custom_call.1} parent=1 // pred_region
      %s571 = ssub.s32 64, 64
      %572 = vsyncadd [#allocation4], %s571
      %s574 = sshll.u32 [#allocation11], 4
      %s575 = int_to_ptr.vmem [resolvable:$true] %s574
      %577 = dma.vmem_to_hbm [thread:$0]  %s575, 64, %s9, [#allocation4]
    $region61: #{tpu_custom_call.1} parent=1 // pred_fallthru
      _
    // Predicated region
    $region62: #{tpu_custom_call.1} parent=1 // pred_check
      _
    $region63: #{tpu_custom_call.1} parent=1 // pred_check_branch
      %579 = sbr.rel (0) target = $region65
    $region64: #{tpu_custom_call.1} parent=1 // pred_region
      %580 = dma.done [#allocation4], 64
    $region65: #{tpu_custom_call.1} parent=1 // pred_fallthru
      _
    %581 = vsyncpa [#allocation3], 1
    %582 = vsyncpa [#allocation6], 1
    %583 = vsyncpa [#allocation9], 1
    %584 = vsyncpa [#allocation4], 1

</llo_original>
